<compile_context>
chip_gen: v7x
topology: tpu7x:2x2x1
jax: 0.10.0
libtpu: 0.0.40
codegen_flags: <defaults>
</compile_context>

<pallas_src>
import functools

import jax
import jax.numpy as jnp
from jax.experimental import pallas as pl
from jax.experimental.pallas import tpu as pltpu

LANE = 128          # feature lanes: all layer widths are zero-padded to 128
SUB = 16            # bf16 sublane tile height
BATCH_BLOCK = 2048  # max batch-tile rows (512 left ~15% of HBM roofline unused)


def _round_up(n, m):
    return (n + m - 1) // m * m


def _layout(input_size):
    """Static row layout of the packed bf16 parameter array.

    Biases are folded into the weights (augmented constant-1 channel), so the
    packed array is just three stacked [K, 128] weight blocks:
      rows [0, xk)           : W1  (K = xk = round_up(input_size + 1, 16))
      rows [xk, xk + 128)    : W2
      rows [xk + 128, +128)  : W3
    All offsets/extents are multiples of 16, so every kernel slice is a whole
    number of bf16 (16, 128) sublane tiles (no per-step sub-tile copies).
    """
    xk = _round_up(input_size + 1, SUB)
    w1_off = 0
    w2_off = xk
    w3_off = xk + LANE
    p_rows = xk + 2 * LANE
    return xk, w1_off, w2_off, w3_off, p_rows


def mlp_kernel(x_ref, p_ref, o_ref, *, xk, w1_off, w2_off, w3_off):
    """Fused Linear->ReLU->Linear->ReLU->Linear on one (bb, xk) batch tile.

    All matmul operands are bf16 (native MXU input dtype on v5e/v6e/v7x) with
    f32 accumulation.  Biases arrive through the constant-1 channel baked into
    the augmented input / hidden activations, so there are no bias loads.
    """
    f32, bf16 = jnp.float32, jnp.bfloat16
    x = x_ref[...]                                         # [bb, xk]   bf16
    w1 = p_ref[w1_off:w1_off + xk, :]                      # [xk, 128]  bf16
    h = jnp.maximum(jnp.dot(x, w1, preferred_element_type=f32), 0.0).astype(bf16)
    w2 = p_ref[w2_off:w2_off + LANE, :]                    # [128, 128] bf16
    h = jnp.maximum(jnp.dot(h, w2, preferred_element_type=f32), 0.0).astype(bf16)
    w3 = p_ref[w3_off:w3_off + LANE, :]                    # [128, 128] bf16
    # Lane-dense 128-wide store (unmasked vst); Q-values live in [:output_size].
    o_ref[...] = jnp.dot(h, w3, preferred_element_type=f32).astype(o_ref.dtype)


def pack_params(params, input_size, hidden, output_size, dtype=jnp.bfloat16):
    """Pack the 3 layers into one [xk + 256, 128] bf16 array with folded biases.

    Weights are stored [in, out] (transposed vs. PyTorch) so the kernel does
    x @ W.  Each layer's bias sits in the row multiplied by the constant-1
    channel (column `input_size` of the augmented input / lane `hidden` of the
    activations); that row also re-emits the constant so the next layer's bias
    works identically.  Zero padding keeps all padded lanes exactly zero
    through every layer (ReLU(0)=0).
    """
    xk, w1_off, w2_off, w3_off, p_rows = _layout(input_size)
    assert input_size + 1 <= xk
    assert hidden + 1 <= LANE and output_size <= LANE
    const = hidden                           # lane carrying the constant-1 channel

    w1, b1 = params["input_layer"]           # [in, hid], [hid]
    w2, b2 = params["hidden_layer"]          # [hid, hid], [hid]
    w3, b3 = params["output_layer"]          # [hid, out], [out]

    p = jnp.zeros((p_rows, LANE), jnp.float32)
    p = p.at[w1_off:w1_off + input_size, :hidden].set(w1)
    p = p.at[w1_off + input_size, :hidden].set(b1)        # b1 row (x const col)
    p = p.at[w1_off + input_size, const].set(1.0)         # create constant lane
    p = p.at[w2_off:w2_off + hidden, :hidden].set(w2)
    p = p.at[w2_off + const, :hidden].set(b2)             # b2 row
    p = p.at[w2_off + const, const].set(1.0)              # propagate constant
    p = p.at[w3_off:w3_off + hidden, :output_size].set(w3)
    p = p.at[w3_off + const, :output_size].set(b3)        # b3 row
    return p.astype(dtype)


@functools.partial(jax.jit, static_argnames=("input_size", "output_size"))
def neural_network_forward(x, packed, *, input_size, output_size):
    """x: [B, input_size] float32; packed: pack_params(...) bf16 array."""
    B = x.shape[0]
    xk, w1_off, w2_off, w3_off, p_rows = _layout(input_size)
    assert packed.shape == (p_rows, LANE)

    # Batch tiling: multiples of 16 (bf16 sublane tile).  Large batches get
    # big tiles (amortize ~0.35us/grid-step), and batches >= 1024 are split
    # into >= 2 tiles so the "parallel" axis actually uses both v7x
    # TensorCores (harmless no-op on single-TC v5e/v6e).
    B16 = _round_up(max(B, 1), SUB)
    if B16 >= 1024:
        bb = min(_round_up(-(-B16 // 2), SUB), BATCH_BLOCK)
    else:
        bb = B16
    B_pad = _round_up(B16, bb)

    # Layout plumbing only: bf16 input augmented with a constant-1 column at
    # `input_size` (carries the biases), padded to xk (=16 here) lanes and to a
    # multiple of the batch tile.  ~30x less input HBM traffic than the old
    # 128-lane f32 pad array.
    x_p = jnp.zeros((B_pad, xk), jnp.bfloat16)
    x_p = x_p.at[:B, :input_size].set(x.astype(jnp.bfloat16))
    x_p = x_p.at[:B, input_size].set(1.0)

    kernel = functools.partial(mlp_kernel, xk=xk, w1_off=w1_off,
                               w2_off=w2_off, w3_off=w3_off)

    out_p = pl.pallas_call(
        kernel,
        out_shape=jax.ShapeDtypeStruct((B_pad, LANE), jnp.bfloat16),
        grid=(B_pad // bb,),
        in_specs=[
            # Batch tile of the (narrow) augmented input; last dim == full dim.
            pl.BlockSpec((bb, xk), lambda i: (i, 0)),
            # Packed parameters, same (only) block for every grid step.
            pl.BlockSpec((p_rows, LANE), lambda i: (0, 0)),
        ],
        out_specs=pl.BlockSpec((bb, LANE), lambda i: (i, 0)),  # lane-dense out
        compiler_params=pltpu.CompilerParams(
            dimension_semantics=("parallel",)),
    )(x_p, packed)

    # bf16 lane-dense output tile -> slice off padding, return f32 like the module.
    return out_p[:B, :output_size].astype(jnp.float32)


def init_params(key, input_size, output_size, hidden):
    """Deterministic init mimicking nn.Linear default U(-1/sqrt(fan_in), +)."""
    def linear(k, fan_in, fan_out):
        kw, kb = jax.random.split(k)
        bound = 1.0 / jnp.sqrt(jnp.float32(fan_in))
        w = jax.random.uniform(kw, (fan_in, fan_out), jnp.float32, -bound, bound)
        b = jax.random.uniform(kb, (fan_out,), jnp.float32, -bound, bound)
        return w, b

    k1, k2, k3 = jax.random.split(key, 3)
    return {
        "input_layer": linear(k1, input_size, hidden),
        "hidden_layer": linear(k2, hidden, hidden),
        "output_layer": linear(k3, hidden, output_size),
    }


def reference_forward(x, params):
    """Pure-JAX reference with the same rounding as the kernel: bf16 params,
    bf16 input/activations, f32 accumulation, bf16 output."""
    bf16, f32 = jnp.bfloat16, jnp.float32
    q = lambda t: t.astype(bf16)
    w1, b1 = params["input_layer"]
    w2, b2 = params["hidden_layer"]
    w3, b3 = params["output_layer"]
    h = x.astype(bf16)
    h = q(jnp.maximum(jnp.dot(h, q(w1), preferred_element_type=f32)
                      + q(b1).astype(f32), 0.0))
    h = q(jnp.maximum(jnp.dot(h, q(w2), preferred_element_type=f32)
                      + q(b2).astype(f32), 0.0))
    out = q(jnp.dot(h, q(w3), preferred_element_type=f32) + q(b3).astype(f32))
    return out.astype(f32)


if __name__ == "__main__":
    # DQN-style MLP: state dim 8, 4 actions, 32 hidden units.
    input_size, output_size, hidden = 8, 4, 32

    key = jax.random.PRNGKey(0)
    kx1, kx2, kp = jax.random.split(key, 3)
    params = init_params(kp, input_size, output_size, hidden)
    packed = pack_params(params, input_size, hidden, output_size)

    # Small acting-style batch.
    x_small = jax.random.normal(kx1, (8, input_size), jnp.float32)
    out_small = jax.block_until_ready(
        neural_network_forward(x_small, packed,
                               input_size=input_size, output_size=output_size))
    ref_small = reference_forward(x_small, params)
    assert out_small.shape == (8, output_size)
    assert jnp.allclose(out_small, ref_small, atol=2e-2, rtol=2e-2), \
        "small-batch mismatch vs. reference"

    # Unaligned training-style batch: exercises padding and the 2-tile
    # "parallel" grid (both TensorCores on v7x).
    x_big = jax.random.normal(kx2, (1056, input_size), jnp.float32)
    out_big = jax.block_until_ready(
        neural_network_forward(x_big, packed,
                               input_size=input_size, output_size=output_size))
    ref_big = reference_forward(x_big, params)
    assert out_big.shape == (1056, output_size)
    assert jnp.allclose(out_big, ref_big, atol=2e-2, rtol=2e-2), \
        "large-batch mismatch vs. reference"

    print("KERNEL_OK")
</pallas_src>

<mosaic_0001>
module attributes {stable_mosaic.version = 11 : i64} {
  func.func @mlp_kernel(%arg0: i32, %arg1: memref<16x16xbf16, #tpu.memory_space<vmem>>, %arg2: memref<272x128xbf16, #tpu.memory_space<vmem>>, %arg3: memref<16x128xbf16, #tpu.memory_space<vmem>>) attributes {dimension_semantics = [#tpu.dimension_semantics<parallel>], iteration_bounds = array<i64: 1>, scalar_prefetch = 0 : i64, scratch_operands = 0 : i64, tpu.core_type = #tpu.core_type<tc>, window_params = [{transform_indices = @transform_0, window_bounds = array<i64: 16, 16>}, {pipeline_mode = #tpu.pipeline_mode<synchronous>, transform_indices = @transform_1, window_bounds = array<i64: 272, 128>}, {transform_indices = @transform_2, window_bounds = array<i64: 16, 128>}]} {
    %c0 = arith.constant 0 : index
    %c0_0 = arith.constant 0 : index
    %0 = vector.load %arg1[%c0, %c0_0] : memref<16x16xbf16, #tpu.memory_space<vmem>>, vector<16x16xbf16>
    %c0_1 = arith.constant 0 : index
    %c0_2 = arith.constant 0 : index
    %1 = vector.load %arg2[%c0_1, %c0_2] : memref<272x128xbf16, #tpu.memory_space<vmem>>, vector<16x128xbf16>
    %cst = arith.constant dense<0.000000e+00> : vector<16x128xf32>
    %2 = tpu.matmul %0, %1, %cst {dimension_numbers = #tpu.dot_dimension_numbers<[1], [0], [0], [1], [0, 0, 1, 1], [], []>} : vector<16x16xbf16>, vector<16x128xbf16>, vector<16x128xf32> -> vector<16x128xf32>
    %cst_3 = arith.constant 0.000000e+00 : f32
    %3 = vector.broadcast %cst_3 : f32 to vector<16x128xf32>
    %4 = arith.maximumf %2, %3 : vector<16x128xf32>
    %5 = arith.truncf %4 : vector<16x128xf32> to vector<16x128xbf16>
    %c16 = arith.constant 16 : index
    %c0_4 = arith.constant 0 : index
    %6 = vector.load %arg2[%c16, %c0_4] : memref<272x128xbf16, #tpu.memory_space<vmem>>, vector<128x128xbf16>
    %cst_5 = arith.constant dense<0.000000e+00> : vector<16x128xf32>
    %7 = tpu.matmul %5, %6, %cst_5 {dimension_numbers = #tpu.dot_dimension_numbers<[1], [0], [0], [1], [0, 0, 1, 1], [], []>} : vector<16x128xbf16>, vector<128x128xbf16>, vector<16x128xf32> -> vector<16x128xf32>
    %cst_6 = arith.constant 0.000000e+00 : f32
    %8 = vector.broadcast %cst_6 : f32 to vector<16x128xf32>
    %9 = arith.maximumf %7, %8 : vector<16x128xf32>
    %10 = arith.truncf %9 : vector<16x128xf32> to vector<16x128xbf16>
    %c144 = arith.constant 144 : index
    %c0_7 = arith.constant 0 : index
    %11 = vector.load %arg2[%c144, %c0_7] : memref<272x128xbf16, #tpu.memory_space<vmem>>, vector<128x128xbf16>
    %cst_8 = arith.constant dense<0.000000e+00> : vector<16x128xf32>
    %12 = tpu.matmul %10, %11, %cst_8 {dimension_numbers = #tpu.dot_dimension_numbers<[1], [0], [0], [1], [0, 0, 1, 1], [], []>} : vector<16x128xbf16>, vector<128x128xbf16>, vector<16x128xf32> -> vector<16x128xf32>
    %13 = arith.truncf %12 : vector<16x128xf32> to vector<16x128xbf16>
    %c0_9 = arith.constant 0 : index
    %c0_10 = arith.constant 0 : index
    %14 = vector.load %arg3[%c0_9, %c0_10] : memref<16x128xbf16, #tpu.memory_space<vmem>>, vector<16x128xbf16>
    tpu.vector_store %arg3[%c0_9, %c0_10], %13 {strides = array<i32>} : memref<16x128xbf16, #tpu.memory_space<vmem>>, vector<16x128xbf16>,
    return
  }
  func.func @transform_0(%arg0: i32) -> (i32, i32) {
    %c0_i32 = arith.constant 0 : i32
    %c0_i32_0 = arith.constant 0 : i32
    return %arg0, %c0_i32 : i32, i32
  }
  func.func @transform_1(%arg0: i32) -> (i32, i32) {
    %c0_i32 = arith.constant 0 : i32
    %c0_i32_0 = arith.constant 0 : i32
    %c0_i32_1 = arith.constant 0 : i32
    return %c0_i32, %c0_i32_0 : i32, i32
  }
  func.func @transform_2(%arg0: i32) -> (i32, i32) {
    %c0_i32 = arith.constant 0 : i32
    %c0_i32_0 = arith.constant 0 : i32
    return %arg0, %c0_i32 : i32, i32
  }
}

</mosaic_0001>

<llo_original>
// kernel: neural_network_forward.1
$region0: #{neural_network_forward.1}
  #allocation0 [shape = 'u32[]', space=smem, size = 0x4, offset = 0x4, fixed_abs, tag = 'smem constant byte address 0x4 - core index']
  #allocation1 [shape = 'u32[144,128]{1,0:T(1,128)}', space=vmem, size = 0x12000, scoped, tag = 'internal scratch']
  %s0 = inlined_call_operand.vmem [shape: bf16[16,16], index: 0, kind: input, shape index: {}]
  %s1 = inlined_call_operand.hbm [shape: bf16[272,128], index: 1, kind: input, shape index: {}]
  %s2 = inlined_call_operand.vmem [shape: bf16[16,128], index: 2, kind: output, shape index: {}]
  %s3 = sld [smem:[#allocation0]]
  $region22: #{neural_network_forward.1} parent=0
    _
  %s5 = ssub.s32 1, %s3
  %s6 = scalar_select 0, %s5, %s3
  $region1: #{neural_network_forward.1} parent=0
    #allocation2 [shape = 'u8[69632]{0}', space=vmem, size = 0x11000, scoped, tag = 'input window, operand 1, single buffered']
    #allocation3 [shape = 's32[1]{0}', space=sflag, size = 0x4, scoped, tag = 'scoped memory for neural_network_forward.1']
    %7 = vsyncpa [#allocation3], 0
    // Predicated region
    $region2: #{neural_network_forward.1} parent=1 // pred_check
      _
    $region3: #{neural_network_forward.1} parent=1 // pred_check_branch
      %9 = sbr.rel (0) target = $region5
    $region4: #{neural_network_forward.1} parent=1 // pred_region
      _
    $region5: #{neural_network_forward.1} parent=1 // pred_fallthru
      _
    // Predicated region
    $region6: #{neural_network_forward.1} parent=1 // pred_check
      _
    $region7: #{neural_network_forward.1} parent=1 // pred_check_branch
      %11 = sbr.rel (0) target = $region9
    $region8: #{neural_network_forward.1} parent=1 // pred_region
      %s13 = ssub.s32 2176, 2176
      %14 = vsyncadd [#allocation3], %s13
      %s15 = sshll.u32 [#allocation2], 4
      %s16 = int_to_ptr.vmem [resolvable:$true] %s15
      %21 = dma.hbm_to_vmem [thread:$0]  %s1, 2176, %s16, [#allocation3], 64, 64, 4
    $region9: #{neural_network_forward.1} parent=1 // pred_fallthru
      _
    // Predicated region
    $region10: #{neural_network_forward.1} parent=1 // pred_check
      _
    $region11: #{neural_network_forward.1} parent=1 // pred_check_branch
      %23 = sbr.rel (0) target = $region13
    $region12: #{neural_network_forward.1} parent=1 // pred_region
      %24 = dma.done [#allocation3], 2176
    $region13: #{neural_network_forward.1} parent=1 // pred_fallthru
      _
    %v26 = vld [vmem:[%s0] sm:$0xf]
    %v27 = vld [vmem:[%s0 + $0x4] sm:$0xf]
    %v28 = vld [vmem:[#allocation2] sm:$0xf]
    %v29 = vld [vmem:[#allocation2 + $0x4] sm:$0xf]
    %v32 = vunpack.c.l.b16 %v26
    %v33 = vunpack.c.l.b16 %v27
    %v34 = vpack.c.b16 %v33, %v32
    %v37 = vunpack.c.l.b16 %v28
    %v38 = vunpack.c.l.b16 %v29
    %v39 = vpack.c.b16 %v38, %v37
    %vm41 = vcmask 130048
    %v43 = vsel %vm41, %v34, 0
    %45 = vmatprep.subr.bf16.mxu0 0
    %46 = vmatpush1.bf16.msra.mxu0 %v39
    %47 = vmatprep.subr.bf16.mxu0 0
    %48 = vmatpush1.bf16.msra.mxu0 0
    %49 = vmatprep.subr.bf16.mxu0 0
    %50 = vmatpush1.bf16.msra.mxu0 0
    %51 = vmatprep.subr.bf16.mxu0 0
    %52 = vmatpush1.bf16.msra.mxu0 0
    %53 = vmatprep.subr.bf16.mxu0 0
    %54 = vmatpush1.bf16.msra.mxu0 0
    %55 = vmatprep.subr.bf16.mxu0 0
    %56 = vmatpush1.bf16.msra.mxu0 0
    %57 = vmatprep.subr.bf16.mxu0 0
    %58 = vmatpush1.bf16.msra.mxu0 0
    %59 = vmatprep.subr.bf16.mxu0 0
    %60 = vmatpush1.bf16.msra.mxu0 0
    %61 = vmatprep.subr.bf16.mxu0 0
    %62 = vmatpush1.bf16.msra.mxu0 0
    %63 = vmatprep.subr.bf16.mxu0 0
    %64 = vmatpush1.bf16.msra.mxu0 0
    %65 = vmatprep.subr.bf16.mxu0 0
    %66 = vmatpush1.bf16.msra.mxu0 0
    %67 = vmatprep.subr.bf16.mxu0 0
    %68 = vmatpush1.bf16.msra.mxu0 0
    %69 = vmatprep.subr.bf16.mxu0 0
    %70 = vmatpush1.bf16.msra.mxu0 0
    %71 = vmatprep.subr.bf16.mxu0 0
    %72 = vmatpush1.bf16.msra.mxu0 0
    %73 = vmatprep.subr.bf16.mxu0 0
    %74 = vmatpush1.bf16.msra.mxu0 0
    %75 = vmatprep.subr.bf16.mxu0 0
    %76 = vmatpush1.bf16.msra.mxu0 0
    %77 = vmatprep.mubr.bf16.mxu0 0
    %78 = vmatmul.mubr.bf16.gmra.mrb[0].mxu0 %v43
    %v79 = vpop.f32.mrb[0].mxu0
    %v80 = vadd.f32 0.0, %v79
    %v81 = vpop.f32.mrb[0].mxu0
    %v82 = vpop.f32.mrb[0].mxu0
    %v83 = vadd.f32 0.0, %v82
    %v84 = vpop.f32.mrb[0].mxu0
    %85 = vdwg.mxu0
    %v86 = vmax.f32 %v80, 0.0
    %v87 = vmax.f32 %v83, 0.0
    %v88 = vpack.c.bf16 %v87, %v86
    %v89 = vld [vmem:[#allocation2 + $0x8] sm:$0xf]
    %v90 = vld [vmem:[#allocation2 + $0xc] sm:$0xf]
    %v91 = vld [vmem:[#allocation2 + $0x10] sm:$0xf]
    %v92 = vld [vmem:[#allocation2 + $0x14] sm:$0xf]
    %v93 = vld [vmem:[#allocation2 + $0x18] sm:$0xf]
    %v94 = vld [vmem:[#allocation2 + $0x1c] sm:$0xf]
    %v95 = vld [vmem:[#allocation2 + $0x20] sm:$0xf]
    %v96 = vld [vmem:[#allocation2 + $0x24] sm:$0xf]
    %v97 = vld [vmem:[#allocation2 + $0x28] sm:$0xf]
    %v98 = vld [vmem:[#allocation2 + $0x2c] sm:$0xf]
    %v99 = vld [vmem:[#allocation2 + $0x30] sm:$0xf]
    %v100 = vld [vmem:[#allocation2 + $0x34] sm:$0xf]
    %v101 = vld [vmem:[#allocation2 + $0x38] sm:$0xf]
    %v102 = vld [vmem:[#allocation2 + $0x3c] sm:$0xf]
    %v103 = vld [vmem:[#allocation2 + $0x40] sm:$0xf]
    %v104 = vld [vmem:[#allocation2 + $0x44] sm:$0xf]
    %v121 = vunpack.c.l.b16 %v89
    %v122 = vunpack.c.l.b16 %v90
    %v123 = vunpack.c.l.b16 %v91
    %v124 = vunpack.c.l.b16 %v92
    %v125 = vunpack.c.l.b16 %v93
    %v126 = vunpack.c.l.b16 %v94
    %v127 = vunpack.c.l.b16 %v95
    %v128 = vunpack.c.l.b16 %v96
    %v129 = vunpack.c.l.b16 %v97
    %v130 = vunpack.c.l.b16 %v98
    %v131 = vunpack.c.l.b16 %v99
    %v132 = vunpack.c.l.b16 %v100
    %v133 = vunpack.c.l.b16 %v101
    %v134 = vunpack.c.l.b16 %v102
    %v135 = vunpack.c.l.b16 %v103
    %v136 = vunpack.c.l.b16 %v104
    %v137 = vpack.c.b16 %v122, %v121
    %v138 = vpack.c.b16 %v124, %v123
    %v139 = vpack.c.b16 %v126, %v125
    %v140 = vpack.c.b16 %v128, %v127
    %v141 = vpack.c.b16 %v130, %v129
    %v142 = vpack.c.b16 %v132, %v131
    %v143 = vpack.c.b16 %v134, %v133
    %v144 = vpack.c.b16 %v136, %v135
    %153 = vmatprep.subr.bf16.mxu0 0
    %154 = vmatpush1.bf16.msra.mxu0 %v137
    %155 = vmatprep.subr.bf16.mxu0 0
    %156 = vmatpush1.bf16.msra.mxu0 %v138
    %157 = vmatprep.subr.bf16.mxu0 0
    %158 = vmatpush1.bf16.msra.mxu0 %v139
    %159 = vmatprep.subr.bf16.mxu0 0
    %160 = vmatpush1.bf16.msra.mxu0 %v140
    %161 = vmatprep.subr.bf16.mxu0 0
    %162 = vmatpush1.bf16.msra.mxu0 %v141
    %163 = vmatprep.subr.bf16.mxu0 0
    %164 = vmatpush1.bf16.msra.mxu0 %v142
    %165 = vmatprep.subr.bf16.mxu0 0
    %166 = vmatpush1.bf16.msra.mxu0 %v143
    %167 = vmatprep.subr.bf16.mxu0 0
    %168 = vmatpush1.bf16.msra.mxu0 %v144
    %169 = vmatprep.subr.bf16.mxu0 0
    %170 = vmatpush1.bf16.msra.mxu0 0
    %171 = vmatprep.subr.bf16.mxu0 0
    %172 = vmatpush1.bf16.msra.mxu0 0
    %173 = vmatprep.subr.bf16.mxu0 0
    %174 = vmatpush1.bf16.msra.mxu0 0
    %175 = vmatprep.subr.bf16.mxu0 0
    %176 = vmatpush1.bf16.msra.mxu0 0
    %177 = vmatprep.subr.bf16.mxu0 0
    %178 = vmatpush1.bf16.msra.mxu0 0
    %179 = vmatprep.subr.bf16.mxu0 0
    %180 = vmatpush1.bf16.msra.mxu0 0
    %181 = vmatprep.subr.bf16.mxu0 0
    %182 = vmatpush1.bf16.msra.mxu0 0
    %183 = vmatprep.subr.bf16.mxu0 0
    %184 = vmatpush1.bf16.msra.mxu0 0
    %185 = vmatprep.mubr.bf16.mxu0 0
    %186 = vmatmul.mubr.bf16.gmra.mrb[0].mxu0 %v88
    %v187 = vpop.f32.mrb[0].mxu0
    %v188 = vadd.f32 0.0, %v187
    %v189 = vpop.f32.mrb[0].mxu0
    %v190 = vpop.f32.mrb[0].mxu0
    %v191 = vadd.f32 0.0, %v190
    %v192 = vpop.f32.mrb[0].mxu0
    %193 = vdwg.mxu0
    %v194 = vmax.f32 %v188, 0.0
    %v195 = vmax.f32 %v191, 0.0
    %v196 = vpack.c.bf16 %v195, %v194
    %v197 = vld [vmem:[#allocation2 + $0x48] sm:$0xf]
    %v198 = vld [vmem:[#allocation2 + $0x4c] sm:$0xf]
    %v199 = vld [vmem:[#allocation2 + $0x50] sm:$0xf]
    %v200 = vld [vmem:[#allocation2 + $0x54] sm:$0xf]
    %v201 = vld [vmem:[#allocation2 + $0x58] sm:$0xf]
    %v202 = vld [vmem:[#allocation2 + $0x5c] sm:$0xf]
    %v203 = vld [vmem:[#allocation2 + $0x60] sm:$0xf]
    %v204 = vld [vmem:[#allocation2 + $0x64] sm:$0xf]
    %v205 = vld [vmem:[#allocation2 + $0x68] sm:$0xf]
    %v206 = vld [vmem:[#allocation2 + $0x6c] sm:$0xf]
    %v207 = vld [vmem:[#allocation2 + $0x70] sm:$0xf]
    %v208 = vld [vmem:[#allocation2 + $0x74] sm:$0xf]
    %v209 = vld [vmem:[#allocation2 + $0x78] sm:$0xf]
    %v210 = vld [vmem:[#allocation2 + $0x7c] sm:$0xf]
    %v211 = vld [vmem:[#allocation2 + $0x80] sm:$0xf]
    %v212 = vld [vmem:[#allocation2 + $0x84] sm:$0xf]
    %v229 = vunpack.c.l.b16 %v197
    %v230 = vunpack.c.l.b16 %v198
    %v231 = vunpack.c.l.b16 %v199
    %v232 = vunpack.c.l.b16 %v200
    %v233 = vunpack.c.l.b16 %v201
    %v234 = vunpack.c.l.b16 %v202
    %v235 = vunpack.c.l.b16 %v203
    %v236 = vunpack.c.l.b16 %v204
    %v237 = vunpack.c.l.b16 %v205
    %v238 = vunpack.c.l.b16 %v206
    %v239 = vunpack.c.l.b16 %v207
    %v240 = vunpack.c.l.b16 %v208
    %v241 = vunpack.c.l.b16 %v209
    %v242 = vunpack.c.l.b16 %v210
    %v243 = vunpack.c.l.b16 %v211
    %v244 = vunpack.c.l.b16 %v212
    %v245 = vpack.c.b16 %v230, %v229
    %v246 = vpack.c.b16 %v232, %v231
    %v247 = vpack.c.b16 %v234, %v233
    %v248 = vpack.c.b16 %v236, %v235
    %v249 = vpack.c.b16 %v238, %v237
    %v250 = vpack.c.b16 %v240, %v239
    %v251 = vpack.c.b16 %v242, %v241
    %v252 = vpack.c.b16 %v244, %v243
    %261 = vmatprep.subr.bf16.mxu0 0
    %262 = vmatpush1.bf16.msra.mxu0 %v245
    %263 = vmatprep.subr.bf16.mxu0 0
    %264 = vmatpush1.bf16.msra.mxu0 %v246
    %265 = vmatprep.subr.bf16.mxu0 0
    %266 = vmatpush1.bf16.msra.mxu0 %v247
    %267 = vmatprep.subr.bf16.mxu0 0
    %268 = vmatpush1.bf16.msra.mxu0 %v248
    %269 = vmatprep.subr.bf16.mxu0 0
    %270 = vmatpush1.bf16.msra.mxu0 %v249
    %271 = vmatprep.subr.bf16.mxu0 0
    %272 = vmatpush1.bf16.msra.mxu0 %v250
    %273 = vmatprep.subr.bf16.mxu0 0
    %274 = vmatpush1.bf16.msra.mxu0 %v251
    %275 = vmatprep.subr.bf16.mxu0 0
    %276 = vmatpush1.bf16.msra.mxu0 %v252
    %277 = vmatprep.subr.bf16.mxu0 0
    %278 = vmatpush1.bf16.msra.mxu0 0
    %279 = vmatprep.subr.bf16.mxu0 0
    %280 = vmatpush1.bf16.msra.mxu0 0
    %281 = vmatprep.subr.bf16.mxu0 0
    %282 = vmatpush1.bf16.msra.mxu0 0
    %283 = vmatprep.subr.bf16.mxu0 0
    %284 = vmatpush1.bf16.msra.mxu0 0
    %285 = vmatprep.subr.bf16.mxu0 0
    %286 = vmatpush1.bf16.msra.mxu0 0
    %287 = vmatprep.subr.bf16.mxu0 0
    %288 = vmatpush1.bf16.msra.mxu0 0
    %289 = vmatprep.subr.bf16.mxu0 0
    %290 = vmatpush1.bf16.msra.mxu0 0
    %291 = vmatprep.subr.bf16.mxu0 0
    %292 = vmatpush1.bf16.msra.mxu0 0
    %293 = vmatprep.mubr.bf16.mxu0 0
    %294 = vmatmul.mubr.bf16.gmra.mrb[0].mxu0 %v196
    %v295 = vpop.f32.mrb[0].mxu0
    %v296 = vadd.f32 0.0, %v295
    %v297 = vpop.f32.mrb[0].mxu0
    %v298 = vpop.f32.mrb[0].mxu0
    %v299 = vadd.f32 0.0, %v298
    %v300 = vpop.f32.mrb[0].mxu0
    %301 = vdwg.mxu0
    %v302 = vpack.c.bf16 %v299, %v296
    %v304 = vunpack.c.l.b16 %v302
    %v305 = vunpack.c.h.b16 %v302
    %v306 = vpack.c.b16 %v304, %v304
    %v307 = vpack.c.b16 %v305, %v305
    %310 = vst [vmem:[%s2] sm:$0xf] %v306
    %311 = vst [vmem:[%s2 + $0x4] sm:$0xf] %v307
    // Predicated region
    $region14: #{neural_network_forward.1} parent=1 // pred_check
      _
    $region15: #{neural_network_forward.1} parent=1 // pred_check_branch
      %313 = sbr.rel (0) target = $region17
    $region16: #{neural_network_forward.1} parent=1 // pred_region
      _
    $region17: #{neural_network_forward.1} parent=1 // pred_fallthru
      _
    // Predicated region
    $region18: #{neural_network_forward.1} parent=1 // pred_check
      _
    $region19: #{neural_network_forward.1} parent=1 // pred_check_branch
      %315 = sbr.rel (0) target = $region21
    $region20: #{neural_network_forward.1} parent=1 // pred_region
      _
    $region21: #{neural_network_forward.1} parent=1 // pred_fallthru
      _
    %316 = vsyncpa [#allocation3], 1

</llo_original>
